<compile_context>
chip_gen: v7x
topology: tpu7x:2x2x1
jax: 0.10.0
libtpu: 0.0.40
codegen_flags: <defaults>
</compile_context>

<pallas_src>
import functools

import jax
import jax.numpy as jnp
import numpy as np
from jax.experimental import pallas as pl
from jax.experimental.pallas import tpu as pltpu


def _round_up(v, m):
    return ((v + m - 1) // m) * m


# ----------------------------- stage 1 ------------------------------------ #
def added_weights_kernel(mask_ref, w_ref, aw_ref, awt_ref):
    # added_weights = mask @ weights, computed once (not per N-tile), in f32 so
    # the returned added_weights match the PyTorch module.
    acc = jnp.dot(mask_ref[...], w_ref[...], preferred_element_type=jnp.float32)
    aw_ref[...] = acc
    # Transposed copy (d_pad, k_pad), already in the stage-2 matmul dtype: the
    # (once-only) XLU transpose here removes any per-tile relayout in stage 2
    # and the wrapper-side re-cast pass over aw.
    awt_ref[...] = acc.T.astype(awt_ref.dtype)


# ----------------------------- stage 2 ------------------------------------ #
def ce_logits_kernel(n_real, tile_n, compute_logits,
                     x_ref, awt_ref, y_ref, bias_ref, *out_refs):
    if compute_logits:
        logits_ref, loss_ref = out_refs
    else:
        (loss_ref,) = out_refs

    # logits = x @ added_weights.T; awt_ref already holds aw^T, so this is a
    # plain contraction over d (no in-kernel transpose of the weights).
    logits = jnp.dot(x_ref[...], awt_ref[...],
                     preferred_element_type=jnp.float32)       # (tn, k_pad) f32
    if compute_logits:
        logits_ref[...] = logits.astype(logits_ref.dtype)

    # Padded (fake) classes are removed with a precomputed additive bias
    # (0 real / -1e30 padded), kept in f32 (bf16 would overflow to -inf).
    masked = logits + bias_ref[...]                            # (tn, k_pad)
    m = jnp.max(masked, axis=-1, keepdims=True)                # (tn, 1)
    lse = m + jnp.log(jnp.sum(jnp.exp(masked - m), axis=-1, keepdims=True))

    col = jax.lax.broadcasted_iota(jnp.int32, masked.shape, 1)
    picked = jnp.sum(jnp.where(col == y_ref[...], logits, 0.0),
                     axis=-1, keepdims=True)                   # (tn, 1)
    perex = lse - picked                                       # (tn, 1)

    # Reduce to a single per-tile partial sum (rows past n masked out) and
    # write it lane-dense: one (1, 128) block instead of a masked (tn, 1)
    # column of vst.msk partial stores.
    row = jax.lax.broadcasted_iota(jnp.int32, (masked.shape[0], 1), 0)
    valid = (pl.program_id(0) * tile_n + row) < n_real
    tile_sum = jnp.sum(jnp.where(valid, perex, 0.0), axis=0, keepdims=True)
    loss_ref[...] = jnp.broadcast_to(tile_sum, loss_ref.shape)


# ----------------------------- wrapper ------------------------------------ #
def cover_tree_loss(weights, x, y, mask, *, tile_n=512, use_bf16=True,
                    compute_logits=True, logits_dtype=jnp.float32,
                    vmem_budget_bytes=48 * 1024 * 1024):
    """weights: (length, d), x: (n, d), y: (n,) int, mask: (k, length) 0/1 path mask.

    Returns (loss, logits[:n,:k] or None, added_weights[:k,:d]).
    """
    length, d = weights.shape
    n = x.shape[0]
    k = mask.shape[0]

    f32 = jnp.float32
    mm_dtype = jnp.bfloat16 if use_bf16 else f32
    mm_sz = jnp.dtype(mm_dtype).itemsize
    logits_sz = jnp.dtype(logits_dtype).itemsize

    k_pad = _round_up(k, 128)
    length_pad = _round_up(length, 128)
    d_pad = _round_up(d, 128)

    # Batch tile: start big (amortize the ~0.35us/step grid overhead on the
    # 128 MiB parts), then shrink until the stage-2 working set fits the VMEM
    # budget chosen for v7x's 64 MiB physical VMEM.
    def est_bytes(tn_):
        b = 2 * tn_ * d_pad * mm_sz                 # x tile, double-buffered
        b += 2 * d_pad * k_pad * mm_sz              # resident aw^T (worst-case 2 bufs)
        b += 2 * tn_ * 4 + 2 * k_pad * 4 + 2 * 128 * 4   # y / bias / loss blocks
        b += tn_ * k_pad * 4                        # in-kernel f32 logits temporary
        if compute_logits:
            b += 2 * tn_ * k_pad * logits_sz        # logits writeback, 2 bufs
        return b

    tn = _round_up(min(tile_n, _round_up(n, 8)), 8)
    while est_bytes(tn) > vmem_budget_bytes and tn > 8:
        tn = max(8, _round_up(tn // 2, 8))
    n_pad = _round_up(n, tn)
    num_tiles = n_pad // tn
    vmem_limit = int(min(max(est_bytes(tn) + (8 << 20), 16 << 20), 64 << 20))

    mask_p = jnp.zeros((k_pad, length_pad), f32).at[:k, :length].set(mask.astype(f32))
    w_p = jnp.zeros((length_pad, d_pad), f32).at[:length, :d].set(weights.astype(f32))
    x_p = jnp.zeros((n_pad, d_pad), mm_dtype).at[:n, :d].set(x.astype(mm_dtype))
    y_p = jnp.zeros((n_pad, 1), jnp.int32).at[:n, 0].set(y.astype(jnp.int32))
    # 0 / -1e30 additive column mask, kept in f32.
    col_bias = jnp.where(jnp.arange(k_pad) < k, 0.0, -1e30).astype(f32).reshape(1, k_pad)

    # Stage 1: added_weights = mask @ weights (single block; runs once) plus the
    # transposed mm_dtype copy for stage 2.
    # TODO(synk): tile stage 1 over k / d (or replace the dense mask matmul with
    # a scalar-prefetch gather-accumulate over the O(depth) path indices) if
    # k*length or length*d outgrow a single VMEM residency.
    aw_p, awt_p = pl.pallas_call(
        added_weights_kernel,
        out_shape=(jax.ShapeDtypeStruct((k_pad, d_pad), f32),
                   jax.ShapeDtypeStruct((d_pad, k_pad), mm_dtype)),
        in_specs=[
            pl.BlockSpec((k_pad, length_pad), lambda: (0, 0)),
            pl.BlockSpec((length_pad, d_pad), lambda: (0, 0)),
        ],
        out_specs=(pl.BlockSpec((k_pad, d_pad), lambda: (0, 0)),
                   pl.BlockSpec((d_pad, k_pad), lambda: (0, 0))),
        cost_estimate=pl.CostEstimate(
            flops=2 * k_pad * length_pad * d_pad,
            transcendentals=0,
            bytes_accessed=4 * (k_pad * length_pad + length_pad * d_pad
                                + k_pad * d_pad) + mm_sz * d_pad * k_pad),
    )(mask_p, w_p)

    # Stage 2: optional logits + per-tile CE partial sums, gridded over N.
    # TODO(synk): for very large k, add a trailing "arbitrary" grid axis over
    # k-blocks with an online-softmax accumulator so aw^T is streamed instead
    # of fully resident in VMEM.
    out_shape = [jax.ShapeDtypeStruct((1, num_tiles * 128), f32)]    # tile sums
    out_specs = [pl.BlockSpec((1, 128), lambda i: (0, i))]
    if compute_logits:
        out_shape = [jax.ShapeDtypeStruct((n_pad, k_pad), logits_dtype)] + out_shape
        out_specs = [pl.BlockSpec((tn, k_pad), lambda i: (i, 0))] + out_specs

    bytes_accessed = (mm_sz * (n_pad * d_pad + d_pad * k_pad)
                      + 4 * n_pad + 4 * k_pad + 4 * num_tiles * 128)
    if compute_logits:
        bytes_accessed += logits_sz * n_pad * k_pad

    outs = pl.pallas_call(
        functools.partial(ce_logits_kernel, n, tn, compute_logits),
        grid=(num_tiles,),
        out_shape=tuple(out_shape),
        in_specs=[
            pl.BlockSpec((tn, d_pad), lambda i: (i, 0)),       # x tile
            # TODO(synk): if Mosaic still double-buffers this constant-index
            # block, add pipeline_mode=pl.Buffered(1) to keep aw^T single-buffered.
            pl.BlockSpec((d_pad, k_pad), lambda i: (0, 0)),    # aw^T (resident)
            pl.BlockSpec((tn, 1), lambda i: (i, 0)),           # labels tile
            pl.BlockSpec((1, k_pad), lambda i: (0, 0)),        # 0/-1e30 column bias
        ],
        out_specs=tuple(out_specs),
        compiler_params=pltpu.CompilerParams(
            # TODO(synk): verify the "parallel" N axis splits across v7x's two
            # TensorCores (xprof); fall back to CORE_PARALLEL if it does not.
            dimension_semantics=("parallel",),
            vmem_limit_bytes=vmem_limit),
        cost_estimate=pl.CostEstimate(
            flops=2 * n_pad * k_pad * d_pad,
            transcendentals=n_pad * (k_pad + 1),
            bytes_accessed=bytes_accessed),
    )(x_p, awt_p, y_p, col_bias)

    if compute_logits:
        logits_p, partial = outs
        logits = logits_p[:n, :k]
    else:
        (partial,) = outs
        logits = None
    loss = jnp.sum(partial[0].reshape(num_tiles, 128)[:, 0]) / n
    return loss, logits, aw_p[:k, :d]


# ------------------------------- glue -------------------------------------- #
def build_mask(k, length, new2index):
    """Dense equivalent of the python path-summation loop in forward()."""
    mask = np.zeros((k, length), dtype=np.float32)
    for j in range(k):
        path = new2index[j]
        mask[j, j] += 1.0               # weights[j, :]
        for ele in path[:-1]:           # ancestor (pseudo-class) nodes
            mask[j, ele] += 1.0
    return jnp.asarray(mask)


def reference(weights, x, y, mask):
    aw = mask @ weights
    logits = x @ aw.T
    lse = jax.nn.logsumexp(logits, axis=-1)
    picked = jnp.take_along_axis(logits, y[:, None], axis=-1)[:, 0]
    return jnp.mean(lse - picked), logits, aw


if __name__ == "__main__":
    # Small synthetic cover tree: k = 4 real classes, 4 pseudo classes (4..7).
    k = 4
    d = 32
    n = 8
    new2index = {
        0: [4, 6, 0],
        1: [4, 6, 1],
        2: [5, 7, 2],
        3: [5, 7, 3],
    }
    length = 8  # max index + 1

    key = jax.random.PRNGKey(0)
    kw, kx, ky = jax.random.split(key, 3)
    # Deterministic init of the Linear(d, length, bias=False) weight: (length, d)
    weights = jax.random.normal(kw, (length, d), dtype=jnp.float32) * 0.1
    x = jax.random.normal(kx, (n, d), dtype=jnp.float32)
    y = jax.random.randint(ky, (n,), 0, k, dtype=jnp.int32)

    mask = build_mask(k, length, new2index)
    ref_loss, ref_logits, ref_aw = reference(weights, x, y, mask)

    # Exact f32 path (matches the PyTorch module up to summation order).
    loss, logits, aw = cover_tree_loss(weights, x, y, mask, use_bf16=False)
    jax.block_until_ready((loss, logits, aw))
    assert jnp.allclose(loss, ref_loss, atol=1e-5), (loss, ref_loss)
    assert jnp.allclose(logits, ref_logits, atol=1e-5)
    assert jnp.allclose(aw, ref_aw, atol=1e-5)

    # Perf-default path: bf16 MXU inputs + bf16 logits writeback (f32 CE math).
    loss_bf, logits_bf, aw_bf = cover_tree_loss(
        weights, x, y, mask, use_bf16=True, logits_dtype=jnp.bfloat16)
    jax.block_until_ready((loss_bf, logits_bf, aw_bf))
    assert jnp.allclose(loss_bf, ref_loss, atol=5e-2, rtol=5e-2), (loss_bf, ref_loss)
    assert jnp.allclose(logits_bf.astype(jnp.float32), ref_logits, atol=1e-1, rtol=5e-2)
    assert jnp.allclose(aw_bf, ref_aw, atol=1e-5)   # stage 1 stays f32

    # Loss-only path (drops the dominant logits HBM writeback entirely).
    loss_only, logits_none, _ = cover_tree_loss(
        weights, x, y, mask, compute_logits=False)
    jax.block_until_ready(loss_only)
    assert logits_none is None
    assert jnp.allclose(loss_only, ref_loss, atol=5e-2, rtol=5e-2)

    print("KERNEL_OK")
</pallas_src>

<mosaic_0001>
module attributes {stable_mosaic.version = 11 : i64} {
  func.func @added_weights_kernel(%arg0: memref<128x128xf32, #tpu.memory_space<vmem>>, %arg1: memref<128x128xf32, #tpu.memory_space<vmem>>, %arg2: memref<128x128xf32, #tpu.memory_space<vmem>>, %arg3: memref<128x128xf32, #tpu.memory_space<vmem>>) attributes {dimension_semantics = [], scalar_prefetch = 0 : i64, scratch_operands = 0 : i64, tpu.core_type = #tpu.core_type<tc>} {
    %c0 = arith.constant 0 : index
    %c0_0 = arith.constant 0 : index
    %0 = vector.load %arg0[%c0, %c0_0] : memref<128x128xf32, #tpu.memory_space<vmem>>, vector<128x128xf32>
    %c0_1 = arith.constant 0 : index
    %c0_2 = arith.constant 0 : index
    %1 = vector.load %arg1[%c0_1, %c0_2] : memref<128x128xf32, #tpu.memory_space<vmem>>, vector<128x128xf32>
    %cst = arith.constant dense<0.000000e+00> : vector<128x128xf32>
    %2 = tpu.matmul %0, %1, %cst {dimension_numbers = #tpu.dot_dimension_numbers<[1], [0], [0], [1], [0, 0, 1, 1], [], []>} : vector<128x128xf32>, vector<128x128xf32>, vector<128x128xf32> -> vector<128x128xf32>
    %c0_3 = arith.constant 0 : index
    %c0_4 = arith.constant 0 : index
    %3 = vector.load %arg2[%c0_3, %c0_4] : memref<128x128xf32, #tpu.memory_space<vmem>>, vector<128x128xf32>
    tpu.vector_store %arg2[%c0_3, %c0_4], %2 {strides = array<i32>} : memref<128x128xf32, #tpu.memory_space<vmem>>, vector<128x128xf32>,
    %4 = tpu.transpose %2, [1, 0] : vector<128x128xf32> -> vector<128x128xf32>
    %c0_5 = arith.constant 0 : index
    %c0_6 = arith.constant 0 : index
    %5 = vector.load %arg3[%c0_5, %c0_6] : memref<128x128xf32, #tpu.memory_space<vmem>>, vector<128x128xf32>
    tpu.vector_store %arg3[%c0_5, %c0_6], %4 {strides = array<i32>} : memref<128x128xf32, #tpu.memory_space<vmem>>, vector<128x128xf32>,
    return
  }
}

</mosaic_0001>

<llo_original>
// kernel: tpu_custom_call.1
$region0: #{tpu_custom_call.1}
  #allocation0 [shape = 'u32[]', space=smem, size = 0x4, offset = 0x4, fixed_abs, tag = 'smem constant byte address 0x4 - core index']
  #allocation1 [shape = 'u32[144,128]{1,0:T(1,128)}', space=vmem, size = 0x12000, scoped, tag = 'internal scratch']
  %s0 = inlined_call_operand.hbm [shape: f32[128,128], index: 0, kind: input, shape index: {}]
  %s1 = inlined_call_operand.hbm [shape: f32[128,128], index: 1, kind: input, shape index: {}]
  %s2 = inlined_call_operand.hbm [shape: f32[128,128], index: 2, kind: output, shape index: {0}]
  %s3 = inlined_call_operand.hbm [shape: f32[128,128], index: 3, kind: output, shape index: {1}]
  %4 = xla_tuple %s2, %s3
  %s5 = sld [smem:[#allocation0]]
  $region34: #{tpu_custom_call.1} parent=0
    _
  %s7 = ssub.s32 1, %s5
  %s8 = scalar_select 0, %s7, %s5
  $region1: #{tpu_custom_call.1} parent=0
    #allocation2 [shape = 'u8[65536]{0}', space=vmem, size = 0x10000, scoped, tag = 'input window, operand 0, single buffered']
    #allocation3 [shape = 's32[1]{0}', space=sflag, size = 0x4, scoped, tag = 'scoped memory for tpu_custom_call.1']
    #allocation4 [shape = 's32[1]{0}', space=sflag, size = 0x4, scoped, tag = 'scoped memory for tpu_custom_call.1']
    #allocation5 [shape = 'u8[65536]{0}', space=vmem, size = 0x10000, scoped, tag = 'input window, operand 1, single buffered']
    #allocation6 [shape = 's32[1]{0}', space=sflag, size = 0x4, scoped, tag = 'scoped memory for tpu_custom_call.1']
    #allocation7 [shape = 'u8[65536]{0}', space=vmem, size = 0x10000, scoped, tag = 'output window, operand 0, single buffered']
    #allocation8 [shape = 'u8[65536]{0}', space=vmem, size = 0x10000, scoped, tag = 'output window, operand 1, single buffered']
    #allocation9 [shape = 's32[1]{0}', space=sflag, size = 0x4, scoped, tag = 'scoped memory for tpu_custom_call.1']
    %9 = vsyncpa [#allocation3], 0
    %10 = vsyncpa [#allocation6], 0
    %11 = vsyncpa [#allocation4], 0
    %12 = vsyncpa [#allocation9], 0
    // Predicated region
    $region2: #{tpu_custom_call.1} parent=1 // pred_check
      _
    $region3: #{tpu_custom_call.1} parent=1 // pred_check_branch
      %14 = sbr.rel (0) target = $region5
    $region4: #{tpu_custom_call.1} parent=1 // pred_region
      %s16 = ssub.s32 2048, 2048
      %17 = vsyncadd [#allocation3], %s16
      %s18 = sshll.u32 [#allocation2], 4
      %s19 = int_to_ptr.vmem [resolvable:$true] %s18
      %24 = dma.hbm_to_vmem [thread:$0]  %s0, 2048, %s19, [#allocation3], 128, 128, 8
    $region5: #{tpu_custom_call.1} parent=1 // pred_fallthru
      _
    // Predicated region
    $region6: #{tpu_custom_call.1} parent=1 // pred_check
      _
    $region7: #{tpu_custom_call.1} parent=1 // pred_check_branch
      %26 = sbr.rel (0) target = $region9
    $region8: #{tpu_custom_call.1} parent=1 // pred_region
      %s28 = ssub.s32 2048, 2048
      %29 = vsyncadd [#allocation6], %s28
      %s30 = sshll.u32 [#allocation5], 4
      %s31 = int_to_ptr.vmem [resolvable:$true] %s30
      %36 = dma.hbm_to_vmem [thread:$0]  %s1, 2048, %s31, [#allocation6], 128, 128, 8
    $region9: #{tpu_custom_call.1} parent=1 // pred_fallthru
      _
    // Predicated region
    $region10: #{tpu_custom_call.1} parent=1 // pred_check
      _
    $region11: #{tpu_custom_call.1} parent=1 // pred_check_branch
      %38 = sbr.rel (0) target = $region13
    $region12: #{tpu_custom_call.1} parent=1 // pred_region
      %39 = dma.done [#allocation3], 2048
    $region13: #{tpu_custom_call.1} parent=1 // pred_fallthru
      _
    // Predicated region
    $region14: #{tpu_custom_call.1} parent=1 // pred_check
      _
    $region15: #{tpu_custom_call.1} parent=1 // pred_check_branch
      %41 = sbr.rel (0) target = $region17
    $region16: #{tpu_custom_call.1} parent=1 // pred_region
      %42 = dma.done [#allocation6], 2048
    $region17: #{tpu_custom_call.1} parent=1 // pred_fallthru
      _
    %v43 = vld [vmem:[#allocation2] sm:$0xff]
    %v44 = vld [vmem:[#allocation2 + $0x8] sm:$0xff]
    %v45 = vld [vmem:[#allocation2 + $0x10] sm:$0xff]
    %v46 = vld [vmem:[#allocation2 + $0x18] sm:$0xff]
    %v47 = vld [vmem:[#allocation2 + $0x20] sm:$0xff]
    %v48 = vld [vmem:[#allocation2 + $0x28] sm:$0xff]
    %v49 = vld [vmem:[#allocation2 + $0x30] sm:$0xff]
    %v50 = vld [vmem:[#allocation2 + $0x38] sm:$0xff]
    %v51 = vld [vmem:[#allocation2 + $0x40] sm:$0xff]
    %v52 = vld [vmem:[#allocation2 + $0x48] sm:$0xff]
    %v53 = vld [vmem:[#allocation2 + $0x50] sm:$0xff]
    %v54 = vld [vmem:[#allocation2 + $0x58] sm:$0xff]
    %v55 = vld [vmem:[#allocation2 + $0x60] sm:$0xff]
    %v56 = vld [vmem:[#allocation2 + $0x68] sm:$0xff]
    %v57 = vld [vmem:[#allocation2 + $0x70] sm:$0xff]
    %v58 = vld [vmem:[#allocation2 + $0x78] sm:$0xff]
    %v59 = vld [vmem:[#allocation5] sm:$0xff]
    %v60 = vld [vmem:[#allocation5 + $0x8] sm:$0xff]
    %v61 = vld [vmem:[#allocation5 + $0x10] sm:$0xff]
    %v62 = vld [vmem:[#allocation5 + $0x18] sm:$0xff]
    %v63 = vld [vmem:[#allocation5 + $0x20] sm:$0xff]
    %v64 = vld [vmem:[#allocation5 + $0x28] sm:$0xff]
    %v65 = vld [vmem:[#allocation5 + $0x30] sm:$0xff]
    %v66 = vld [vmem:[#allocation5 + $0x38] sm:$0xff]
    %v67 = vld [vmem:[#allocation5 + $0x40] sm:$0xff]
    %v68 = vld [vmem:[#allocation5 + $0x48] sm:$0xff]
    %v69 = vld [vmem:[#allocation5 + $0x50] sm:$0xff]
    %v70 = vld [vmem:[#allocation5 + $0x58] sm:$0xff]
    %v71 = vld [vmem:[#allocation5 + $0x60] sm:$0xff]
    %v72 = vld [vmem:[#allocation5 + $0x68] sm:$0xff]
    %v73 = vld [vmem:[#allocation5 + $0x70] sm:$0xff]
    %v74 = vld [vmem:[#allocation5 + $0x78] sm:$0xff]
    %75 = vmatprep.subr.mxu0 0.0
    %76 = vmatpush1.msra.mxu0 %v59
    %77 = vmatprep.subr.mxu0 0.0
    %78 = vmatpush1.msra.mxu0 %v60
    %79 = vmatprep.subr.mxu0 0.0
    %80 = vmatpush1.msra.mxu0 %v61
    %81 = vmatprep.subr.mxu0 0.0
    %82 = vmatpush1.msra.mxu0 %v62
    %83 = vmatprep.subr.mxu0 0.0
    %84 = vmatpush1.msra.mxu0 %v63
    %85 = vmatprep.subr.mxu0 0.0
    %86 = vmatpush1.msra.mxu0 %v64
    %87 = vmatprep.subr.mxu0 0.0
    %88 = vmatpush1.msra.mxu0 %v65
    %89 = vmatprep.subr.mxu0 0.0
    %90 = vmatpush1.msra.mxu0 %v66
    %91 = vmatprep.subr.mxu0 0.0
    %92 = vmatpush1.msra.mxu0 %v67
    %93 = vmatprep.subr.mxu0 0.0
    %94 = vmatpush1.msra.mxu0 %v68
    %95 = vmatprep.subr.mxu0 0.0
    %96 = vmatpush1.msra.mxu0 %v69
    %97 = vmatprep.subr.mxu0 0.0
    %98 = vmatpush1.msra.mxu0 %v70
    %99 = vmatprep.subr.mxu0 0.0
    %100 = vmatpush1.msra.mxu0 %v71
    %101 = vmatprep.subr.mxu0 0.0
    %102 = vmatpush1.msra.mxu0 %v72
    %103 = vmatprep.subr.mxu0 0.0
    %104 = vmatpush1.msra.mxu0 %v73
    %105 = vmatprep.subr.mxu0 0.0
    %106 = vmatpush1.msra.mxu0 %v74
    %107 = vmatprep.subr.mxu0 0.0
    %108 = vmatpush1.msra.mxu0 0.0
    %109 = vmatprep.subr.mxu0 0.0
    %110 = vmatpush1.msra.mxu0 0.0
    %111 = vmatprep.subr.mxu0 0.0
    %112 = vmatpush1.msra.mxu0 0.0
    %113 = vmatprep.subr.mxu0 0.0
    %114 = vmatpush1.msra.mxu0 0.0
    %115 = vmatprep.subr.mxu0 0.0
    %116 = vmatpush1.msra.mxu0 0.0
    %117 = vmatprep.subr.mxu0 0.0
    %118 = vmatpush1.msra.mxu0 0.0
    %119 = vmatprep.subr.mxu0 0.0
    %120 = vmatpush1.msra.mxu0 0.0
    %121 = vmatprep.subr.mxu0 0.0
    %122 = vmatpush1.msra.mxu0 0.0
    %123 = vmatprep.subr.mxu0 0.0
    %124 = vmatpush1.msra.mxu0 0.0
    %125 = vmatprep.subr.mxu0 0.0
    %126 = vmatpush1.msra.mxu0 0.0
    %127 = vmatprep.subr.mxu0 0.0
    %128 = vmatpush1.msra.mxu0 0.0
    %129 = vmatprep.subr.mxu0 0.0
    %130 = vmatpush1.msra.mxu0 0.0
    %131 = vmatprep.subr.mxu0 0.0
    %132 = vmatpush1.msra.mxu0 0.0
    %133 = vmatprep.subr.mxu0 0.0
    %134 = vmatpush1.msra.mxu0 0.0
    %135 = vmatprep.subr.mxu0 0.0
    %136 = vmatpush1.msra.mxu0 0.0
    %137 = vmatprep.subr.mxu0 0.0
    %138 = vmatpush1.msra.mxu0 0.0
    %139 = vmatprep.mubr.f32.mxu0 0.0
    %140 = vmatmul.mubr.f32.gmra.mrb[0].mxu0 %v43
    %v141 = vpop.f32.mrb[0].mxu0
    %v142 = vadd.f32 0.0, %v141
    %v143 = vpop.f32.mrb[0].mxu0
    %144 = vmatprep.mubr.f32.mxu0 0.0
    %145 = vmatmul.mubr.f32.gmra.mrb[0].mxu0 %v44
    %v146 = vpop.f32.mrb[0].mxu0
    %v147 = vadd.f32 0.0, %v146
    %v148 = vpop.f32.mrb[0].mxu0
    %149 = vmatprep.mubr.f32.mxu0 0.0
    %150 = vmatmul.mubr.f32.gmra.mrb[0].mxu0 %v45
    %v151 = vpop.f32.mrb[0].mxu0
    %v152 = vadd.f32 0.0, %v151
    %v153 = vpop.f32.mrb[0].mxu0
    %154 = vmatprep.mubr.f32.mxu0 0.0
    %155 = vmatmul.mubr.f32.gmra.mrb[0].mxu0 %v46
    %v156 = vpop.f32.mrb[0].mxu0
    %v157 = vadd.f32 0.0, %v156
    %v158 = vpop.f32.mrb[0].mxu0
    %159 = vmatprep.mubr.f32.mxu0 0.0
    %160 = vmatmul.mubr.f32.gmra.mrb[0].mxu0 %v47
    %v161 = vpop.f32.mrb[0].mxu0
    %v162 = vadd.f32 0.0, %v161
    %v163 = vpop.f32.mrb[0].mxu0
    %164 = vmatprep.mubr.f32.mxu0 0.0
    %165 = vmatmul.mubr.f32.gmra.mrb[0].mxu0 %v48
    %v166 = vpop.f32.mrb[0].mxu0
    %v167 = vadd.f32 0.0, %v166
    %v168 = vpop.f32.mrb[0].mxu0
    %169 = vmatprep.mubr.f32.mxu0 0.0
    %170 = vmatmul.mubr.f32.gmra.mrb[0].mxu0 %v49
    %v171 = vpop.f32.mrb[0].mxu0
    %v172 = vadd.f32 0.0, %v171
    %v173 = vpop.f32.mrb[0].mxu0
    %174 = vmatprep.mubr.f32.mxu0 0.0
    %175 = vmatmul.mubr.f32.gmra.mrb[0].mxu0 %v50
    %v176 = vpop.f32.mrb[0].mxu0
    %v177 = vadd.f32 0.0, %v176
    %v178 = vpop.f32.mrb[0].mxu0
    %179 = vmatprep.mubr.f32.mxu0 0.0
    %180 = vmatmul.mubr.f32.gmra.mrb[0].mxu0 %v51
    %v181 = vpop.f32.mrb[0].mxu0
    %v182 = vadd.f32 0.0, %v181
    %v183 = vpop.f32.mrb[0].mxu0
    %184 = vmatprep.mubr.f32.mxu0 0.0
    %185 = vmatmul.mubr.f32.gmra.mrb[0].mxu0 %v52
    %v186 = vpop.f32.mrb[0].mxu0
    %v187 = vadd.f32 0.0, %v186
    %v188 = vpop.f32.mrb[0].mxu0
    %189 = vmatprep.mubr.f32.mxu0 0.0
    %190 = vmatmul.mubr.f32.gmra.mrb[0].mxu0 %v53
    %v191 = vpop.f32.mrb[0].mxu0
    %v192 = vadd.f32 0.0, %v191
    %v193 = vpop.f32.mrb[0].mxu0
    %194 = vmatprep.mubr.f32.mxu0 0.0
    %195 = vmatmul.mubr.f32.gmra.mrb[0].mxu0 %v54
    %v196 = vpop.f32.mrb[0].mxu0
    %v197 = vadd.f32 0.0, %v196
    %v198 = vpop.f32.mrb[0].mxu0
    %199 = vmatprep.mubr.f32.mxu0 0.0
    %200 = vmatmul.mubr.f32.gmra.mrb[0].mxu0 %v55
    %v201 = vpop.f32.mrb[0].mxu0
    %v202 = vadd.f32 0.0, %v201
    %v203 = vpop.f32.mrb[0].mxu0
    %204 = vmatprep.mubr.f32.mxu0 0.0
    %205 = vmatmul.mubr.f32.gmra.mrb[0].mxu0 %v56
    %v206 = vpop.f32.mrb[0].mxu0
    %v207 = vadd.f32 0.0, %v206
    %v208 = vpop.f32.mrb[0].mxu0
    %209 = vmatprep.mubr.f32.mxu0 0.0
    %210 = vmatmul.mubr.f32.gmra.mrb[0].mxu0 %v57
    %v211 = vpop.f32.mrb[0].mxu0
    %v212 = vadd.f32 0.0, %v211
    %v213 = vpop.f32.mrb[0].mxu0
    %214 = vmatprep.mubr.f32.mxu0 0.0
    %215 = vmatmul.mubr.f32.gmra.mrb[0].mxu0 %v58
    %v216 = vpop.f32.mrb[0].mxu0
    %v217 = vadd.f32 0.0, %v216
    %v218 = vpop.f32.mrb[0].mxu0
    %219 = vdwg.mxu0
    %220 = vst [vmem:[#allocation7] sm:$0xff] %v142
    %221 = vst [vmem:[#allocation7 + $0x8] sm:$0xff] %v147
    %222 = vst [vmem:[#allocation7 + $0x10] sm:$0xff] %v152
    %223 = vst [vmem:[#allocation7 + $0x18] sm:$0xff] %v157
    %224 = vst [vmem:[#allocation7 + $0x20] sm:$0xff] %v162
    %225 = vst [vmem:[#allocation7 + $0x28] sm:$0xff] %v167
    %226 = vst [vmem:[#allocation7 + $0x30] sm:$0xff] %v172
    %227 = vst [vmem:[#allocation7 + $0x38] sm:$0xff] %v177
    %228 = vst [vmem:[#allocation7 + $0x40] sm:$0xff] %v182
    %229 = vst [vmem:[#allocation7 + $0x48] sm:$0xff] %v187
    %230 = vst [vmem:[#allocation7 + $0x50] sm:$0xff] %v192
    %231 = vst [vmem:[#allocation7 + $0x58] sm:$0xff] %v197
    %232 = vst [vmem:[#allocation7 + $0x60] sm:$0xff] %v202
    %233 = vst [vmem:[#allocation7 + $0x68] sm:$0xff] %v207
    %234 = vst [vmem:[#allocation7 + $0x70] sm:$0xff] %v212
    %235 = vst [vmem:[#allocation7 + $0x78] sm:$0xff] %v217
    %236 = vxpose.xlu0.b32.start [1/16] %v142, 128
    %237 = vxpose.xlu0.b32.cont [2/16] %v147, 128
    %238 = vxpose.xlu0.b32.cont [3/16] %v152, 128
    %239 = vxpose.xlu0.b32.cont [4/16] %v157, 128
    %240 = vxpose.xlu0.b32.cont [5/16] %v162, 128
    %241 = vxpose.xlu0.b32.cont [6/16] %v167, 128
    %242 = vxpose.xlu0.b32.cont [7/16] %v172, 128
    %243 = vxpose.xlu0.b32.cont [8/16] %v177, 128
    %244 = vxpose.xlu0.b32.cont [9/16] %v182, 128
    %245 = vxpose.xlu0.b32.cont [10/16] %v187, 128
    %246 = vxpose.xlu0.b32.cont [11/16] %v192, 128
    %247 = vxpose.xlu0.b32.cont [12/16] %v197, 128
    %248 = vxpose.xlu0.b32.cont [13/16] %v202, 128
    %249 = vxpose.xlu0.b32.cont [14/16] %v207, 128
    %250 = vxpose.xlu0.b32.cont [15/16] %v212, 128
    %251 = vxpose.xlu0.b32.end [16/16] %v217, 128
    %v252 = vpop.trf.xlu0
    %v253 = vpop.trf.xlu0
    %v254 = vpop.trf.xlu0
    %v255 = vpop.trf.xlu0
    %v256 = vpop.trf.xlu0
    %v257 = vpop.trf.xlu0
    %v258 = vpop.trf.xlu0
    %v259 = vpop.trf.xlu0
    %v260 = vpop.trf.xlu0
    %v261 = vpop.trf.xlu0
    %v262 = vpop.trf.xlu0
    %v263 = vpop.trf.xlu0
    %v264 = vpop.trf.xlu0
    %v265 = vpop.trf.xlu0
    %v266 = vpop.trf.xlu0
    %v267 = vpop.trf.xlu0
    %268 = vst [vmem:[#allocation8] sm:$0xff] %v252
    %269 = vst [vmem:[#allocation8 + $0x8] sm:$0xff] %v253
    %270 = vst [vmem:[#allocation8 + $0x10] sm:$0xff] %v254
    %271 = vst [vmem:[#allocation8 + $0x18] sm:$0xff] %v255
    %272 = vst [vmem:[#allocation8 + $0x20] sm:$0xff] %v256
    %273 = vst [vmem:[#allocation8 + $0x28] sm:$0xff] %v257
    %274 = vst [vmem:[#allocation8 + $0x30] sm:$0xff] %v258
    %275 = vst [vmem:[#allocation8 + $0x38] sm:$0xff] %v259
    %276 = vst [vmem:[#allocation8 + $0x40] sm:$0xff] %v260
    %277 = vst [vmem:[#allocation8 + $0x48] sm:$0xff] %v261
    %278 = vst [vmem:[#allocation8 + $0x50] sm:$0xff] %v262
    %279 = vst [vmem:[#allocation8 + $0x58] sm:$0xff] %v263
    %280 = vst [vmem:[#allocation8 + $0x60] sm:$0xff] %v264
    %281 = vst [vmem:[#allocation8 + $0x68] sm:$0xff] %v265
    %282 = vst [vmem:[#allocation8 + $0x70] sm:$0xff] %v266
    %283 = vst [vmem:[#allocation8 + $0x78] sm:$0xff] %v267
    // Predicated region
    $region18: #{tpu_custom_call.1} parent=1 // pred_check
      _
    $region19: #{tpu_custom_call.1} parent=1 // pred_check_branch
      %285 = sbr.rel (0) target = $region21
    $region20: #{tpu_custom_call.1} parent=1 // pred_region
      %s287 = ssub.s32 2048, 2048
      %288 = vsyncadd [#allocation4], %s287
      %s289 = sshll.u32 [#allocation7], 4
      %s290 = int_to_ptr.vmem [resolvable:$true] %s289
      %295 = dma.vmem_to_hbm [thread:$0]  %s290, 2048, %s2, [#allocation4], 128, 128, 8
    $region21: #{tpu_custom_call.1} parent=1 // pred_fallthru
      _
    // Predicated region
    $region22: #{tpu_custom_call.1} parent=1 // pred_check
      _
    $region23: #{tpu_custom_call.1} parent=1 // pred_check_branch
      %297 = sbr.rel (0) target = $region25
    $region24: #{tpu_custom_call.1} parent=1 // pred_region
      %s299 = ssub.s32 2048, 2048
      %300 = vsyncadd [#allocation9], %s299
      %s301 = sshll.u32 [#allocation8], 4
      %s302 = int_to_ptr.vmem [resolvable:$true] %s301
      %307 = dma.vmem_to_hbm [thread:$0]  %s302, 2048, %s3, [#allocation9], 128, 128, 8
    $region25: #{tpu_custom_call.1} parent=1 // pred_fallthru
      _
    // Predicated region
    $region26: #{tpu_custom_call.1} parent=1 // pred_check
      _
    $region27: #{tpu_custom_call.1} parent=1 // pred_check_branch
      %309 = sbr.rel (0) target = $region29
    $region28: #{tpu_custom_call.1} parent=1 // pred_region
      %310 = dma.done [#allocation4], 2048
    $region29: #{tpu_custom_call.1} parent=1 // pred_fallthru
      _
    // Predicated region
    $region30: #{tpu_custom_call.1} parent=1 // pred_check
      _
    $region31: #{tpu_custom_call.1} parent=1 // pred_check_branch
      %312 = sbr.rel (0) target = $region33
    $region32: #{tpu_custom_call.1} parent=1 // pred_region
      %313 = dma.done [#allocation9], 2048
    $region33: #{tpu_custom_call.1} parent=1 // pred_fallthru
      _
    %314 = vsyncpa [#allocation3], 1
    %315 = vsyncpa [#allocation6], 1
    %316 = vsyncpa [#allocation4], 1
    %317 = vsyncpa [#allocation9], 1

</llo_original>
